<compile_context>
chip_gen: v5e
topology: v5e:2x2
jax: 0.10.0
libtpu: 0.0.40
codegen_flags: <defaults>
</compile_context>

<pallas_src>
import functools

import jax
import jax.numpy as jnp
from jax.experimental import pallas as pl
from jax.experimental.pallas import tpu as pltpu

ACTION_DIM = 1
ACTION_RANGE = 2.0
H1 = 300
H2 = 400

# Lane-padded sizes (multiples of 128) for dense vregs and clean MXU tiles.
H1_PAD = 384
H2_PAD = 512
A_PAD = 128


def _round_up(x, m):
    return ((x + m - 1) // m) * m


def actor_kernel(x_ref, w1_ref, b1_ref, w2_ref, b2_ref, w3_ref, b3_ref, o_ref):
    # fc1 + relu: bf16 MXU inputs, f32 accumulate, f32 elementwise.
    h = jnp.dot(x_ref[...], w1_ref[...], preferred_element_type=jnp.float32)
    h = jnp.maximum(h + b1_ref[...], 0.0)
    # fc2 + relu
    h = jnp.dot(h.astype(jnp.bfloat16), w2_ref[...], preferred_element_type=jnp.float32)
    h = jnp.maximum(h + b2_ref[...], 0.0)
    # fc3 + tanh * action_range (output lanes padded to 128; wrapper slices to action_dim)
    h = jnp.dot(h.astype(jnp.bfloat16), w3_ref[...], preferred_element_type=jnp.float32)
    o_ref[...] = (jnp.tanh(h + b3_ref[...]) * ACTION_RANGE).astype(o_ref.dtype)


@jax.jit
def actor_forward(state, params):
    w1, b1, w2, b2, w3, b3 = params
    batch, state_dim = state.shape
    k_pad = _round_up(state_dim, 128)

    # Batch tiling: small batches -> single padded tile; large batches -> 128-row tiles.
    if batch <= 128:
        m_pad = _round_up(batch, 16)
        tm = m_pad
    else:
        tm = 128
        m_pad = _round_up(batch, tm)
    grid_m = m_pad // tm

    # Zero-pad everything; matmul inputs to bf16, biases stay f32.
    xp = jnp.zeros((m_pad, k_pad), jnp.bfloat16).at[:batch, :state_dim].set(
        state.astype(jnp.bfloat16))
    w1p = jnp.zeros((k_pad, H1_PAD), jnp.bfloat16).at[:state_dim, :H1].set(
        w1.astype(jnp.bfloat16))
    b1p = jnp.zeros((1, H1_PAD), jnp.float32).at[:, :H1].set(b1)
    w2p = jnp.zeros((H1_PAD, H2_PAD), jnp.bfloat16).at[:H1, :H2].set(
        w2.astype(jnp.bfloat16))
    b2p = jnp.zeros((1, H2_PAD), jnp.float32).at[:, :H2].set(b2)
    w3p = jnp.zeros((H2_PAD, A_PAD), jnp.bfloat16).at[:H2, :ACTION_DIM].set(
        w3.astype(jnp.bfloat16))
    b3p = jnp.zeros((1, A_PAD), jnp.float32).at[:, :ACTION_DIM].set(b3)

    flops = 2 * m_pad * (k_pad * H1_PAD + H1_PAD * H2_PAD + H2_PAD * A_PAD)
    bytes_accessed = (
        xp.size * 2 + w1p.size * 2 + w2p.size * 2 + w3p.size * 2
        + (b1p.size + b2p.size + b3p.size) * 4 + m_pad * A_PAD * 4)

    # Weights/biases: constant block index -> fetched once, VMEM-resident across grid steps.
    const = lambda shape: pl.BlockSpec(shape, lambda i: (0, 0))

    out_padded = pl.pallas_call(
        actor_kernel,
        out_shape=jax.ShapeDtypeStruct((m_pad, A_PAD), jnp.float32),
        grid=(grid_m,),
        in_specs=[
            pl.BlockSpec((tm, k_pad), lambda i: (i, 0)),
            const((k_pad, H1_PAD)), const((1, H1_PAD)),
            const((H1_PAD, H2_PAD)), const((1, H2_PAD)),
            const((H2_PAD, A_PAD)), const((1, A_PAD)),
        ],
        out_specs=pl.BlockSpec((tm, A_PAD), lambda i: (i, 0)),
        compiler_params=pltpu.CompilerParams(
            dimension_semantics=("parallel",)),
        cost_estimate=pl.CostEstimate(
            flops=flops,
            transcendentals=m_pad * A_PAD,
            bytes_accessed=bytes_accessed),
    )(xp, w1p, b1p, w2p, b2p, w3p, b3p)

    return out_padded[:batch, :ACTION_DIM]


def actor_reference(state, params):
    # Pure-JAX f32 reference (mirrors the PyTorch forward).
    w1, b1, w2, b2, w3, b3 = params
    a = jnp.maximum(state @ w1 + b1, 0.0)
    a = jnp.maximum(a @ w2 + b2, 0.0)
    return jnp.tanh(a @ w3 + b3) * ACTION_RANGE


def init_params(key, state_dim):
    # Deterministic init mirroring nn.Linear's default U(-1/sqrt(fan_in), 1/sqrt(fan_in)).
    # Weights stored as [in_features, out_features] (transposed vs. PyTorch).
    def linear(key, fan_in, fan_out):
        kw, kb = jax.random.split(key)
        bound = 1.0 / jnp.sqrt(fan_in)
        w = jax.random.uniform(kw, (fan_in, fan_out), jnp.float32, -bound, bound)
        b = jax.random.uniform(kb, (1, fan_out), jnp.float32, -bound, bound)
        return w, b

    k1, k2, k3 = jax.random.split(key, 3)
    w1, b1 = linear(k1, state_dim, H1)
    w2, b2 = linear(k2, H1, H2)
    w3, b3 = linear(k3, H2, ACTION_DIM)
    return (w1, b1, w2, b2, w3, b3)


if __name__ == "__main__":
    key = jax.random.PRNGKey(0)
    k_params, k_state = jax.random.split(key)

    batch, state_dim = 2, 16
    params = init_params(k_params, state_dim)
    state = jax.random.normal(k_state, (batch, state_dim), jnp.float32)

    out = actor_forward(state, params)
    jax.block_until_ready(out)

    ref = actor_reference(state, params)
    assert out.shape == (batch, ACTION_DIM)
    assert bool(jnp.all(jnp.abs(out) <= ACTION_RANGE + 1e-4))
    # bf16 matmul inputs -> ~1e-2 level error vs f32 reference is expected.
    assert bool(jnp.allclose(out, ref, atol=5e-2, rtol=5e-2)), (out, ref)
    print("KERNEL_OK")
</pallas_src>

<mosaic_0001>
module attributes {stable_mosaic.version = 11 : i64} {
  func.func @actor_kernel(%arg0: i32, %arg1: memref<16x128xbf16, #tpu.memory_space<vmem>>, %arg2: memref<128x384xbf16, #tpu.memory_space<vmem>>, %arg3: memref<1x384xf32, #tpu.memory_space<vmem>>, %arg4: memref<384x512xbf16, #tpu.memory_space<vmem>>, %arg5: memref<1x512xf32, #tpu.memory_space<vmem>>, %arg6: memref<512x128xbf16, #tpu.memory_space<vmem>>, %arg7: memref<1x128xf32, #tpu.memory_space<vmem>>, %arg8: memref<16x128xf32, #tpu.memory_space<vmem>>) attributes {dimension_semantics = [#tpu.dimension_semantics<parallel>], iteration_bounds = array<i64: 1>, scalar_prefetch = 0 : i64, scratch_operands = 0 : i64, tpu.core_type = #tpu.core_type<tc>, window_params = [{transform_indices = @transform_0, window_bounds = array<i64: 16, 128>}, {pipeline_mode = #tpu.pipeline_mode<synchronous>, transform_indices = @transform_1, window_bounds = array<i64: 128, 384>}, {pipeline_mode = #tpu.pipeline_mode<synchronous>, transform_indices = @transform_2, window_bounds = array<i64: 1, 384>}, {pipeline_mode = #tpu.pipeline_mode<synchronous>, transform_indices = @transform_3, window_bounds = array<i64: 384, 512>}, {pipeline_mode = #tpu.pipeline_mode<synchronous>, transform_indices = @transform_4, window_bounds = array<i64: 1, 512>}, {pipeline_mode = #tpu.pipeline_mode<synchronous>, transform_indices = @transform_5, window_bounds = array<i64: 512, 128>}, {pipeline_mode = #tpu.pipeline_mode<synchronous>, transform_indices = @transform_6, window_bounds = array<i64: 1, 128>}, {transform_indices = @transform_7, window_bounds = array<i64: 16, 128>}]} {
    %c0 = arith.constant 0 : index
    %c0_0 = arith.constant 0 : index
    %0 = vector.load %arg1[%c0, %c0_0] : memref<16x128xbf16, #tpu.memory_space<vmem>>, vector<16x128xbf16>
    %c0_1 = arith.constant 0 : index
    %c0_2 = arith.constant 0 : index
    %1 = vector.load %arg2[%c0_1, %c0_2] : memref<128x384xbf16, #tpu.memory_space<vmem>>, vector<128x384xbf16>
    %cst = arith.constant dense<0.000000e+00> : vector<16x384xf32>
    %2 = tpu.matmul %0, %1, %cst {dimension_numbers = #tpu.dot_dimension_numbers<[1], [0], [0], [1], [0, 0, 1, 1], [], []>} : vector<16x128xbf16>, vector<128x384xbf16>, vector<16x384xf32> -> vector<16x384xf32>
    %c0_3 = arith.constant 0 : index
    %c0_4 = arith.constant 0 : index
    %3 = vector.load %arg3[%c0_3, %c0_4] : memref<1x384xf32, #tpu.memory_space<vmem>>, vector<1x384xf32>
    %4 = vector.broadcast %3 : vector<1x384xf32> to vector<16x384xf32>
    %5 = arith.addf %2, %4 : vector<16x384xf32>
    %cst_5 = arith.constant 0.000000e+00 : f32
    %6 = vector.broadcast %cst_5 : f32 to vector<16x384xf32>
    %7 = arith.maximumf %5, %6 : vector<16x384xf32>
    %8 = arith.truncf %7 : vector<16x384xf32> to vector<16x384xbf16>
    %c0_6 = arith.constant 0 : index
    %c0_7 = arith.constant 0 : index
    %9 = vector.load %arg4[%c0_6, %c0_7] : memref<384x512xbf16, #tpu.memory_space<vmem>>, vector<384x512xbf16>
    %cst_8 = arith.constant dense<0.000000e+00> : vector<16x512xf32>
    %10 = tpu.matmul %8, %9, %cst_8 {dimension_numbers = #tpu.dot_dimension_numbers<[1], [0], [0], [1], [0, 0, 1, 1], [], []>} : vector<16x384xbf16>, vector<384x512xbf16>, vector<16x512xf32> -> vector<16x512xf32>
    %c0_9 = arith.constant 0 : index
    %c0_10 = arith.constant 0 : index
    %11 = vector.load %arg5[%c0_9, %c0_10] : memref<1x512xf32, #tpu.memory_space<vmem>>, vector<1x512xf32>
    %12 = vector.broadcast %11 : vector<1x512xf32> to vector<16x512xf32>
    %13 = arith.addf %10, %12 : vector<16x512xf32>
    %cst_11 = arith.constant 0.000000e+00 : f32
    %14 = vector.broadcast %cst_11 : f32 to vector<16x512xf32>
    %15 = arith.maximumf %13, %14 : vector<16x512xf32>
    %16 = arith.truncf %15 : vector<16x512xf32> to vector<16x512xbf16>
    %c0_12 = arith.constant 0 : index
    %c0_13 = arith.constant 0 : index
    %17 = vector.load %arg6[%c0_12, %c0_13] : memref<512x128xbf16, #tpu.memory_space<vmem>>, vector<512x128xbf16>
    %cst_14 = arith.constant dense<0.000000e+00> : vector<16x128xf32>
    %18 = tpu.matmul %16, %17, %cst_14 {dimension_numbers = #tpu.dot_dimension_numbers<[1], [0], [0], [1], [0, 0, 1, 1], [], []>} : vector<16x512xbf16>, vector<512x128xbf16>, vector<16x128xf32> -> vector<16x128xf32>
    %c0_15 = arith.constant 0 : index
    %c0_16 = arith.constant 0 : index
    %19 = vector.load %arg7[%c0_15, %c0_16] : memref<1x128xf32, #tpu.memory_space<vmem>>, vector<1x128xf32>
    %20 = vector.broadcast %19 : vector<1x128xf32> to vector<16x128xf32>
    %21 = arith.addf %18, %20 : vector<16x128xf32>
    %22 = math.tanh %21 : vector<16x128xf32>
    %cst_17 = arith.constant 2.000000e+00 : f32
    %23 = vector.broadcast %cst_17 : f32 to vector<16x128xf32>
    %24 = arith.mulf %22, %23 : vector<16x128xf32>
    %c0_18 = arith.constant 0 : index
    %c0_19 = arith.constant 0 : index
    %25 = vector.load %arg8[%c0_18, %c0_19] : memref<16x128xf32, #tpu.memory_space<vmem>>, vector<16x128xf32>
    tpu.vector_store %arg8[%c0_18, %c0_19], %24 {strides = array<i32>} : memref<16x128xf32, #tpu.memory_space<vmem>>, vector<16x128xf32>,
    return
  }
  func.func @transform_0(%arg0: i32) -> (i32, i32) {
    %c0_i32 = arith.constant 0 : i32
    %c0_i32_0 = arith.constant 0 : i32
    return %arg0, %c0_i32 : i32, i32
  }
  func.func @transform_1(%arg0: i32) -> (i32, i32) {
    %c0_i32 = arith.constant 0 : i32
    %c0_i32_0 = arith.constant 0 : i32
    %c0_i32_1 = arith.constant 0 : i32
    return %c0_i32, %c0_i32_0 : i32, i32
  }
  func.func @transform_2(%arg0: i32) -> (i32, i32) {
    %c0_i32 = arith.constant 0 : i32
    %c0_i32_0 = arith.constant 0 : i32
    %c0_i32_1 = arith.constant 0 : i32
    return %c0_i32, %c0_i32_0 : i32, i32
  }
  func.func @transform_3(%arg0: i32) -> (i32, i32) {
    %c0_i32 = arith.constant 0 : i32
    %c0_i32_0 = arith.constant 0 : i32
    %c0_i32_1 = arith.constant 0 : i32
    return %c0_i32, %c0_i32_0 : i32, i32
  }
  func.func @transform_4(%arg0: i32) -> (i32, i32) {
    %c0_i32 = arith.constant 0 : i32
    %c0_i32_0 = arith.constant 0 : i32
    %c0_i32_1 = arith.constant 0 : i32
    return %c0_i32, %c0_i32_0 : i32, i32
  }
  func.func @transform_5(%arg0: i32) -> (i32, i32) {
    %c0_i32 = arith.constant 0 : i32
    %c0_i32_0 = arith.constant 0 : i32
    %c0_i32_1 = arith.constant 0 : i32
    return %c0_i32, %c0_i32_0 : i32, i32
  }
  func.func @transform_6(%arg0: i32) -> (i32, i32) {
    %c0_i32 = arith.constant 0 : i32
    %c0_i32_0 = arith.constant 0 : i32
    %c0_i32_1 = arith.constant 0 : i32
    return %c0_i32, %c0_i32_0 : i32, i32
  }
  func.func @transform_7(%arg0: i32) -> (i32, i32) {
    %c0_i32 = arith.constant 0 : i32
    %c0_i32_0 = arith.constant 0 : i32
    return %arg0, %c0_i32 : i32, i32
  }
}

</mosaic_0001>

<llo_original>
// kernel: actor_forward.1
$region0: #{actor_forward.1}
  #allocation0 [shape = 'u32[]', space=smem, size = 0x4, offset = 0x4, fixed_abs, tag = 'smem constant byte address 0x4 - core index']
  #allocation1 [shape = 'u32[72,128]{1,0:T(1,128)}', space=vmem, size = 0x9000, scoped, tag = 'internal scratch']
  %s0 = inlined_call_operand.vmem [shape: bf16[16,128], index: 0, kind: input, shape index: {}]
  %s1 = inlined_call_operand.vmem [shape: bf16[128,384], index: 1, kind: input, shape index: {}]
  %s2 = inlined_call_operand.vmem [shape: f32[1,384], index: 2, kind: input, shape index: {}]
  %s3 = inlined_call_operand.vmem [shape: bf16[384,512], index: 3, kind: input, shape index: {}]
  %s4 = inlined_call_operand.vmem [shape: f32[1,512], index: 4, kind: input, shape index: {}]
  %s5 = inlined_call_operand.vmem [shape: bf16[512,128], index: 5, kind: input, shape index: {}]
  %s6 = inlined_call_operand.vmem [shape: f32[1,128], index: 6, kind: input, shape index: {}]
  %s7 = inlined_call_operand.vmem [shape: f32[16,128], index: 7, kind: output, shape index: {}]
  %s8 = sld [smem:[#allocation0]]
  $region38: #{actor_forward.1} parent=0
    _
  %s10 = ssub.s32 1, %s8
  %s11 = scalar_select 0, %s10, %s8
  // Predicated region
  $region2: #{actor_forward.1} parent=0 // pred_check
    _
  $region3: #{actor_forward.1} parent=0 // pred_check_branch
    %13 = sbr.rel (0) target = $region5
  $region4: #{actor_forward.1} parent=0 // pred_region
    _
  $region5: #{actor_forward.1} parent=0 // pred_fallthru
    _
  // Predicated region
  $region6: #{actor_forward.1} parent=0 // pred_check
    _
  $region7: #{actor_forward.1} parent=0 // pred_check_branch
    %15 = sbr.rel (0) target = $region9
  $region8: #{actor_forward.1} parent=0 // pred_region
    _
  $region9: #{actor_forward.1} parent=0 // pred_fallthru
    _
  // Predicated region
  $region10: #{actor_forward.1} parent=0 // pred_check
    _
  $region11: #{actor_forward.1} parent=0 // pred_check_branch
    %17 = sbr.rel (0) target = $region13
  $region12: #{actor_forward.1} parent=0 // pred_region
    _
  $region13: #{actor_forward.1} parent=0 // pred_fallthru
    _
  // Predicated region
  $region14: #{actor_forward.1} parent=0 // pred_check
    _
  $region15: #{actor_forward.1} parent=0 // pred_check_branch
    %19 = sbr.rel (0) target = $region17
  $region16: #{actor_forward.1} parent=0 // pred_region
    _
  $region17: #{actor_forward.1} parent=0 // pred_fallthru
    _
  // Predicated region
  $region18: #{actor_forward.1} parent=0 // pred_check
    _
  $region19: #{actor_forward.1} parent=0 // pred_check_branch
    %21 = sbr.rel (0) target = $region21
  $region20: #{actor_forward.1} parent=0 // pred_region
    _
  $region21: #{actor_forward.1} parent=0 // pred_fallthru
    _
  // Predicated region
  $region22: #{actor_forward.1} parent=0 // pred_check
    _
  $region23: #{actor_forward.1} parent=0 // pred_check_branch
    %23 = sbr.rel (0) target = $region25
  $region24: #{actor_forward.1} parent=0 // pred_region
    _
  $region25: #{actor_forward.1} parent=0 // pred_fallthru
    _
  // Predicated region
  $region26: #{actor_forward.1} parent=0 // pred_check
    _
  $region27: #{actor_forward.1} parent=0 // pred_check_branch
    %25 = sbr.rel (0) target = $region29
  $region28: #{actor_forward.1} parent=0 // pred_region
    _
  $region29: #{actor_forward.1} parent=0 // pred_fallthru
    _
  %v26 = vld [vmem:[%s0] sm:$0xf]
  %v27 = vld [vmem:[%s0 + $0x4] sm:$0xf]
  %v28 = vld [vmem:[%s1] sm:$0xff]
  %v29 = vld [vmem:[%s1 + $0x8] sm:$0xf]
  %v30 = vld [vmem:[%s1 + $0xc] sm:$0xff]
  %v31 = vld [vmem:[%s1 + $0x14] sm:$0xf]
  %v32 = vld [vmem:[%s1 + $0x18] sm:$0xff]
  %v33 = vld [vmem:[%s1 + $0x20] sm:$0xf]
  %v34 = vld [vmem:[%s1 + $0x24] sm:$0xff]
  %v35 = vld [vmem:[%s1 + $0x2c] sm:$0xf]
  %v36 = vld [vmem:[%s1 + $0x30] sm:$0xff]
  %v37 = vld [vmem:[%s1 + $0x38] sm:$0xf]
  %v38 = vld [vmem:[%s1 + $0x3c] sm:$0xff]
  %v39 = vld [vmem:[%s1 + $0x44] sm:$0xf]
  %v40 = vld [vmem:[%s1 + $0x48] sm:$0xff]
  %v41 = vld [vmem:[%s1 + $0x50] sm:$0xf]
  %v42 = vld [vmem:[%s1 + $0x54] sm:$0xff]
  %v43 = vld [vmem:[%s1 + $0x5c] sm:$0xf]
  %v44 = vld [vmem:[%s1 + $0x60] sm:$0xff]
  %v45 = vld [vmem:[%s1 + $0x68] sm:$0xf]
  %v46 = vld [vmem:[%s1 + $0x6c] sm:$0xff]
  %v47 = vld [vmem:[%s1 + $0x74] sm:$0xf]
  %v48 = vld [vmem:[%s1 + $0x78] sm:$0xff]
  %v49 = vld [vmem:[%s1 + $0x80] sm:$0xf]
  %v50 = vld [vmem:[%s1 + $0x84] sm:$0xff]
  %v51 = vld [vmem:[%s1 + $0x8c] sm:$0xf]
  %v52 = vld [vmem:[%s1 + $0x90] sm:$0xff]
  %v53 = vld [vmem:[%s1 + $0x98] sm:$0xf]
  %v54 = vld [vmem:[%s1 + $0x9c] sm:$0xff]
  %v55 = vld [vmem:[%s1 + $0xa4] sm:$0xf]
  %v56 = vld [vmem:[%s1 + $0xa8] sm:$0xff]
  %v57 = vld [vmem:[%s1 + $0xb0] sm:$0xf]
  %v58 = vld [vmem:[%s1 + $0xb4] sm:$0xff]
  %v59 = vld [vmem:[%s1 + $0xbc] sm:$0xf]
  %v60 = vld [vmem:[%s2] sm:$0x7]
  %v62 = vperm.slane %v60, 0
  %v63 = vperm.slane %v60, 1
  %v64 = vperm.slane %v60, 2
  %v70 = vunpack.c.l.b16 %v26
  %v71 = vunpack.c.l.b16 %v27
  %v72 = vpack.c.b16 %v71, %v70
  %v106 = vunpack.c.l.b16 %v28
  %v107 = vunpack.c.h.b16 %v28
  %v108 = vunpack.c.l.b16 %v29
  %v109 = vunpack.c.l.b16 %v30
  %v110 = vunpack.c.h.b16 %v30
  %v111 = vunpack.c.l.b16 %v31
  %v112 = vunpack.c.l.b16 %v32
  %v113 = vunpack.c.h.b16 %v32
  %v114 = vunpack.c.l.b16 %v33
  %v115 = vunpack.c.l.b16 %v34
  %v116 = vunpack.c.h.b16 %v34
  %v117 = vunpack.c.l.b16 %v35
  %v118 = vunpack.c.l.b16 %v36
  %v119 = vunpack.c.h.b16 %v36
  %v120 = vunpack.c.l.b16 %v37
  %v121 = vunpack.c.l.b16 %v38
  %v122 = vunpack.c.h.b16 %v38
  %v123 = vunpack.c.l.b16 %v39
  %v124 = vunpack.c.l.b16 %v40
  %v125 = vunpack.c.h.b16 %v40
  %v126 = vunpack.c.l.b16 %v41
  %v127 = vunpack.c.l.b16 %v42
  %v128 = vunpack.c.h.b16 %v42
  %v129 = vunpack.c.l.b16 %v43
  %v130 = vunpack.c.l.b16 %v44
  %v131 = vunpack.c.h.b16 %v44
  %v132 = vunpack.c.l.b16 %v45
  %v133 = vunpack.c.l.b16 %v46
  %v134 = vunpack.c.h.b16 %v46
  %v135 = vunpack.c.l.b16 %v47
  %v136 = vunpack.c.l.b16 %v48
  %v137 = vunpack.c.h.b16 %v48
  %v138 = vunpack.c.l.b16 %v49
  %v139 = vunpack.c.l.b16 %v50
  %v140 = vunpack.c.h.b16 %v50
  %v141 = vunpack.c.l.b16 %v51
  %v142 = vunpack.c.l.b16 %v52
  %v143 = vunpack.c.h.b16 %v52
  %v144 = vunpack.c.l.b16 %v53
  %v145 = vunpack.c.l.b16 %v54
  %v146 = vunpack.c.h.b16 %v54
  %v147 = vunpack.c.l.b16 %v55
  %v148 = vunpack.c.l.b16 %v56
  %v149 = vunpack.c.h.b16 %v56
  %v150 = vunpack.c.l.b16 %v57
  %v151 = vunpack.c.l.b16 %v58
  %v152 = vunpack.c.h.b16 %v58
  %v153 = vunpack.c.l.b16 %v59
  %v154 = vpack.c.b16 %v109, %v106
  %v155 = vpack.c.b16 %v110, %v107
  %v156 = vpack.c.b16 %v111, %v108
  %v157 = vpack.c.b16 %v115, %v112
  %v158 = vpack.c.b16 %v116, %v113
  %v159 = vpack.c.b16 %v117, %v114
  %v160 = vpack.c.b16 %v121, %v118
  %v161 = vpack.c.b16 %v122, %v119
  %v162 = vpack.c.b16 %v123, %v120
  %v163 = vpack.c.b16 %v127, %v124
  %v164 = vpack.c.b16 %v128, %v125
  %v165 = vpack.c.b16 %v129, %v126
  %v166 = vpack.c.b16 %v133, %v130
  %v167 = vpack.c.b16 %v134, %v131
  %v168 = vpack.c.b16 %v135, %v132
  %v169 = vpack.c.b16 %v139, %v136
  %v170 = vpack.c.b16 %v140, %v137
  %v171 = vpack.c.b16 %v141, %v138
  %v172 = vpack.c.b16 %v145, %v142
  %v173 = vpack.c.b16 %v146, %v143
  %v174 = vpack.c.b16 %v147, %v144
  %v175 = vpack.c.b16 %v151, %v148
  %v176 = vpack.c.b16 %v152, %v149
  %v177 = vpack.c.b16 %v153, %v150
  %202 = vmatpush.bf16.msra.mxu0 %v175
  %203 = vmatpush.bf16.msra.mxu0 %v172
  %204 = vmatpush.bf16.msra.mxu0 %v169
  %205 = vmatpush.bf16.msra.mxu0 %v166
  %206 = vmatpush.bf16.msra.mxu0 %v163
  %207 = vmatpush.bf16.msra.mxu0 %v160
  %208 = vmatpush.bf16.msra.mxu0 %v157
  %209 = vmatpush.bf16.msra.mxu0 %v154
  %210 = vmatmul.bf16.gmra.mxu0 %v72
  %v211 = vpop.f32.mrf.mxu0
  %v212 = vadd.f32 %v62, %v211
  %v213 = vpop.f32.mrf.mxu0
  %v214 = vadd.f32 %v62, %v213
  %215 = vdwg.mxu0
  %216 = vmatpush.bf16.msra.mxu0 %v176
  %217 = vmatpush.bf16.msra.mxu0 %v173
  %218 = vmatpush.bf16.msra.mxu0 %v170
  %219 = vmatpush.bf16.msra.mxu0 %v167
  %220 = vmatpush.bf16.msra.mxu0 %v164
  %221 = vmatpush.bf16.msra.mxu0 %v161
  %222 = vmatpush.bf16.msra.mxu0 %v158
  %223 = vmatpush.bf16.msra.mxu0 %v155
  %224 = vmatmul.bf16.gmra.mxu0 %v72
  %v225 = vpop.f32.mrf.mxu0
  %v226 = vadd.f32 %v63, %v225
  %v227 = vpop.f32.mrf.mxu0
  %v228 = vadd.f32 %v63, %v227
  %229 = vdwg.mxu0
  %230 = vmatpush.bf16.msra.mxu0 %v177
  %231 = vmatpush.bf16.msra.mxu0 %v174
  %232 = vmatpush.bf16.msra.mxu0 %v171
  %233 = vmatpush.bf16.msra.mxu0 %v168
  %234 = vmatpush.bf16.msra.mxu0 %v165
  %235 = vmatpush.bf16.msra.mxu0 %v162
  %236 = vmatpush.bf16.msra.mxu0 %v159
  %237 = vmatpush.bf16.msra.mxu0 %v156
  %238 = vmatmul.bf16.gmra.mxu0 %v72
  %v239 = vpop.f32.mrf.mxu0
  %v240 = vadd.f32 %v64, %v239
  %v241 = vpop.f32.mrf.mxu0
  %v242 = vadd.f32 %v64, %v241
  %243 = vdwg.mxu0
  %v244 = vmax.f32 %v212, 0.0
  %v245 = vmax.f32 %v226, 0.0
  %v246 = vmax.f32 %v240, 0.0
  %v247 = vmax.f32 %v214, 0.0
  %v248 = vmax.f32 %v228, 0.0
  %v249 = vmax.f32 %v242, 0.0
  %v250 = vpack.c.bf16 %v247, %v244
  %v251 = vpack.c.bf16 %v248, %v245
  %v252 = vpack.c.bf16 %v249, %v246
  %v253 = vld [vmem:[%s3] sm:$0xff]
  %v254 = vld [vmem:[%s3 + $0x8] sm:$0xff]
  %v255 = vld [vmem:[%s3 + $0x10] sm:$0xff]
  %v256 = vld [vmem:[%s3 + $0x18] sm:$0xff]
  %v257 = vld [vmem:[%s3 + $0x20] sm:$0xff]
  %v258 = vld [vmem:[%s3 + $0x28] sm:$0xff]
  %v259 = vld [vmem:[%s3 + $0x30] sm:$0xff]
  %v260 = vld [vmem:[%s3 + $0x38] sm:$0xff]
  %v261 = vld [vmem:[%s3 + $0x40] sm:$0xff]
  %v262 = vld [vmem:[%s3 + $0x48] sm:$0xff]
  %v263 = vld [vmem:[%s3 + $0x50] sm:$0xff]
  %v264 = vld [vmem:[%s3 + $0x58] sm:$0xff]
  %v265 = vld [vmem:[%s3 + $0x60] sm:$0xff]
  %v266 = vld [vmem:[%s3 + $0x68] sm:$0xff]
  %v267 = vld [vmem:[%s3 + $0x70] sm:$0xff]
  %v268 = vld [vmem:[%s3 + $0x78] sm:$0xff]
  %v269 = vld [vmem:[%s3 + $0x80] sm:$0xff]
  %v270 = vld [vmem:[%s3 + $0x88] sm:$0xff]
  %v271 = vld [vmem:[%s3 + $0x90] sm:$0xff]
  %v272 = vld [vmem:[%s3 + $0x98] sm:$0xff]
  %v273 = vld [vmem:[%s3 + $0xa0] sm:$0xff]
  %v274 = vld [vmem:[%s3 + $0xa8] sm:$0xff]
  %v275 = vld [vmem:[%s3 + $0xb0] sm:$0xff]
  %v276 = vld [vmem:[%s3 + $0xb8] sm:$0xff]
  %v277 = vld [vmem:[%s3 + $0xc0] sm:$0xff]
  %v278 = vld [vmem:[%s3 + $0xc8] sm:$0xff]
  %v279 = vld [vmem:[%s3 + $0xd0] sm:$0xff]
  %v280 = vld [vmem:[%s3 + $0xd8] sm:$0xff]
  %v281 = vld [vmem:[%s3 + $0xe0] sm:$0xff]
  %v282 = vld [vmem:[%s3 + $0xe8] sm:$0xff]
  %v283 = vld [vmem:[%s3 + $0xf0] sm:$0xff]
  %v284 = vld [vmem:[%s3 + $0xf8] sm:$0xff]
  %v285 = vld [vmem:[%s3 + $0x100] sm:$0xff]
  %v286 = vld [vmem:[%s3 + $0x108] sm:$0xff]
  %v287 = vld [vmem:[%s3 + $0x110] sm:$0xff]
  %v288 = vld [vmem:[%s3 + $0x118] sm:$0xff]
  %v289 = vld [vmem:[%s3 + $0x120] sm:$0xff]
  %v290 = vld [vmem:[%s3 + $0x128] sm:$0xff]
  %v291 = vld [vmem:[%s3 + $0x130] sm:$0xff]
  %v292 = vld [vmem:[%s3 + $0x138] sm:$0xff]
  %v293 = vld [vmem:[%s3 + $0x140] sm:$0xff]
  %v294 = vld [vmem:[%s3 + $0x148] sm:$0xff]
  %v295 = vld [vmem:[%s3 + $0x150] sm:$0xff]
  %v296 = vld [vmem:[%s3 + $0x158] sm:$0xff]
  %v297 = vld [vmem:[%s3 + $0x160] sm:$0xff]
  %v298 = vld [vmem:[%s3 + $0x168] sm:$0xff]
  %v299 = vld [vmem:[%s3 + $0x170] sm:$0xff]
  %v300 = vld [vmem:[%s3 + $0x178] sm:$0xff]
  %v301 = vld [vmem:[%s3 + $0x180] sm:$0xff]
  %v302 = vld [vmem:[%s3 + $0x188] sm:$0xff]
  %v303 = vld [vmem:[%s3 + $0x190] sm:$0xff]
  %v304 = vld [vmem:[%s3 + $0x198] sm:$0xff]
  %v305 = vld [vmem:[%s3 + $0x1a0] sm:$0xff]
  %v306 = vld [vmem:[%s3 + $0x1a8] sm:$0xff]
  %v307 = vld [vmem:[%s3 + $0x1b0] sm:$0xff]
  %v308 = vld [vmem:[%s3 + $0x1b8] sm:$0xff]
  %v309 = vld [vmem:[%s3 + $0x1c0] sm:$0xff]
  %v310 = vld [vmem:[%s3 + $0x1c8] sm:$0xff]
  %v311 = vld [vmem:[%s3 + $0x1d0] sm:$0xff]
  %v312 = vld [vmem:[%s3 + $0x1d8] sm:$0xff]
  %v313 = vld [vmem:[%s3 + $0x1e0] sm:$0xff]
  %v314 = vld [vmem:[%s3 + $0x1e8] sm:$0xff]
  %v315 = vld [vmem:[%s3 + $0x1f0] sm:$0xff]
  %v316 = vld [vmem:[%s3 + $0x1f8] sm:$0xff]
  %v317 = vld [vmem:[%s3 + $0x200] sm:$0xff]
  %v318 = vld [vmem:[%s3 + $0x208] sm:$0xff]
  %v319 = vld [vmem:[%s3 + $0x210] sm:$0xff]
  %v320 = vld [vmem:[%s3 + $0x218] sm:$0xff]
  %v321 = vld [vmem:[%s3 + $0x220] sm:$0xff]
  %v322 = vld [vmem:[%s3 + $0x228] sm:$0xff]
  %v323 = vld [vmem:[%s3 + $0x230] sm:$0xff]
  %v324 = vld [vmem:[%s3 + $0x238] sm:$0xff]
  %v325 = vld [vmem:[%s3 + $0x240] sm:$0xff]
  %v326 = vld [vmem:[%s3 + $0x248] sm:$0xff]
  %v327 = vld [vmem:[%s3 + $0x250] sm:$0xff]
  %v328 = vld [vmem:[%s3 + $0x258] sm:$0xff]
  %v329 = vld [vmem:[%s3 + $0x260] sm:$0xff]
  %v330 = vld [vmem:[%s3 + $0x268] sm:$0xff]
  %v331 = vld [vmem:[%s3 + $0x270] sm:$0xff]
  %v332 = vld [vmem:[%s3 + $0x278] sm:$0xff]
  %v333 = vld [vmem:[%s3 + $0x280] sm:$0xff]
  %v334 = vld [vmem:[%s3 + $0x288] sm:$0xff]
  %v335 = vld [vmem:[%s3 + $0x290] sm:$0xff]
  %v336 = vld [vmem:[%s3 + $0x298] sm:$0xff]
  %v337 = vld [vmem:[%s3 + $0x2a0] sm:$0xff]
  %v338 = vld [vmem:[%s3 + $0x2a8] sm:$0xff]
  %v339 = vld [vmem:[%s3 + $0x2b0] sm:$0xff]
  %v340 = vld [vmem:[%s3 + $0x2b8] sm:$0xff]
  %v341 = vld [vmem:[%s3 + $0x2c0] sm:$0xff]
  %v342 = vld [vmem:[%s3 + $0x2c8] sm:$0xff]
  %v343 = vld [vmem:[%s3 + $0x2d0] sm:$0xff]
  %v344 = vld [vmem:[%s3 + $0x2d8] sm:$0xff]
  %v345 = vld [vmem:[%s3 + $0x2e0] sm:$0xff]
  %v346 = vld [vmem:[%s3 + $0x2e8] sm:$0xff]
  %v347 = vld [vmem:[%s3 + $0x2f0] sm:$0xff]
  %v348 = vld [vmem:[%s3 + $0x2f8] sm:$0xff]
  %v349 = vld [vmem:[%s4] sm:$0xf]
  %v351 = vperm.slane %v349, 0
  %v352 = vperm.slane %v349, 1
  %v353 = vperm.slane %v349, 2
  %v354 = vperm.slane %v349, 3
  %v455 = vunpack.c.l.b16 %v253
  %v456 = vunpack.c.h.b16 %v253
  %v457 = vunpack.c.l.b16 %v254
  %v458 = vunpack.c.h.b16 %v254
  %v459 = vunpack.c.l.b16 %v255
  %v460 = vunpack.c.h.b16 %v255
  %v461 = vunpack.c.l.b16 %v256
  %v462 = vunpack.c.h.b16 %v256
  %v463 = vunpack.c.l.b16 %v257
  %v464 = vunpack.c.h.b16 %v257
  %v465 = vunpack.c.l.b16 %v258
  %v466 = vunpack.c.h.b16 %v258
  %v467 = vunpack.c.l.b16 %v259
  %v468 = vunpack.c.h.b16 %v259
  %v469 = vunpack.c.l.b16 %v260
  %v470 = vunpack.c.h.b16 %v260
  %v471 = vunpack.c.l.b16 %v261
  %v472 = vunpack.c.h.b16 %v261
  %v473 = vunpack.c.l.b16 %v262
  %v474 = vunpack.c.h.b16 %v262
  %v475 = vunpack.c.l.b16 %v263
  %v476 = vunpack.c.h.b16 %v263
  %v477 = vunpack.c.l.b16 %v264
  %v478 = vunpack.c.h.b16 %v264
  %v479 = vunpack.c.l.b16 %v265
  %v480 = vunpack.c.h.b16 %v265
  %v481 = vunpack.c.l.b16 %v266
  %v482 = vunpack.c.h.b16 %v266
  %v483 = vunpack.c.l.b16 %v267
  %v484 = vunpack.c.h.b16 %v267
  %v485 = vunpack.c.l.b16 %v268
  %v486 = vunpack.c.h.b16 %v268
  %v487 = vunpack.c.l.b16 %v269
  %v488 = vunpack.c.h.b16 %v269
  %v489 = vunpack.c.l.b16 %v270
  %v490 = vunpack.c.h.b16 %v270
  %v491 = vunpack.c.l.b16 %v271
  %v492 = vunpack.c.h.b16 %v271
  %v493 = vunpack.c.l.b16 %v272
  %v494 = vunpack.c.h.b16 %v272
  %v495 = vunpack.c.l.b16 %v273
  %v496 = vunpack.c.h.b16 %v273
  %v497 = vunpack.c.l.b16 %v274
  %v498 = vunpack.c.h.b16 %v274
  %v499 = vunpack.c.l.b16 %v275
  %v500 = vunpack.c.h.b16 %v275
  %v501 = vunpack.c.l.b16 %v276
  %v502 = vunpack.c.h.b16 %v276
  %v503 = vunpack.c.l.b16 %v277
  %v504 = vunpack.c.h.b16 %v277
  %v505 = vunpack.c.l.b16 %v278
  %v506 = vunpack.c.h.b16 %v278
  %v507 = vunpack.c.l.b16 %v279
  %v508 = vunpack.c.h.b16 %v279
  %v509 = vunpack.c.l.b16 %v280
  %v510 = vunpack.c.h.b16 %v280
  %v511 = vunpack.c.l.b16 %v281
  %v512 = vunpack.c.h.b16 %v281
  %v513 = vunpack.c.l.b16 %v282
  %v514 = vunpack.c.h.b16 %v282
  %v515 = vunpack.c.l.b16 %v283
  %v516 = vunpack.c.h.b16 %v283
  %v517 = vunpack.c.l.b16 %v284
  %v518 = vunpack.c.h.b16 %v284
  %v519 = vunpack.c.l.b16 %v285
  %v520 = vunpack.c.h.b16 %v285
  %v521 = vunpack.c.l.b16 %v286
  %v522 = vunpack.c.h.b16 %v286
  %v523 = vunpack.c.l.b16 %v287
  %v524 = vunpack.c.h.b16 %v287
  %v525 = vunpack.c.l.b16 %v288
  %v526 = vunpack.c.h.b16 %v288
  %v527 = vunpack.c.l.b16 %v289
  %v528 = vunpack.c.h.b16 %v289
  %v529 = vunpack.c.l.b16 %v290
  %v530 = vunpack.c.h.b16 %v290
  %v531 = vunpack.c.l.b16 %v291
  %v532 = vunpack.c.h.b16 %v291
  %v533 = vunpack.c.l.b16 %v292
  %v534 = vunpack.c.h.b16 %v292
  %v535 = vunpack.c.l.b16 %v293
  %v536 = vunpack.c.h.b16 %v293
  %v537 = vunpack.c.l.b16 %v294
  %v538 = vunpack.c.h.b16 %v294
  %v539 = vunpack.c.l.b16 %v295
  %v540 = vunpack.c.h.b16 %v295
  %v541 = vunpack.c.l.b16 %v296
  %v542 = vunpack.c.h.b16 %v296
  %v543 = vunpack.c.l.b16 %v297
  %v544 = vunpack.c.h.b16 %v297
  %v545 = vunpack.c.l.b16 %v298
  %v546 = vunpack.c.h.b16 %v298
  %v547 = vunpack.c.l.b16 %v299
  %v548 = vunpack.c.h.b16 %v299
  %v549 = vunpack.c.l.b16 %v300
  %v550 = vunpack.c.h.b16 %v300
  %v551 = vunpack.c.l.b16 %v301
  %v552 = vunpack.c.h.b16 %v301
  %v553 = vunpack.c.l.b16 %v302
  %v554 = vunpack.c.h.b16 %v302
  %v555 = vunpack.c.l.b16 %v303
  %v556 = vunpack.c.h.b16 %v303
  %v557 = vunpack.c.l.b16 %v304
  %v558 = vunpack.c.h.b16 %v304
  %v559 = vunpack.c.l.b16 %v305
  %v560 = vunpack.c.h.b16 %v305
  %v561 = vunpack.c.l.b16 %v306
  %v562 = vunpack.c.h.b16 %v306
  %v563 = vunpack.c.l.b16 %v307
  %v564 = vunpack.c.h.b16 %v307
  %v565 = vunpack.c.l.b16 %v308
  %v566 = vunpack.c.h.b16 %v308
  %v567 = vunpack.c.l.b16 %v309
  %v568 = vunpack.c.h.b16 %v309
  %v569 = vunpack.c.l.b16 %v310
  %v570 = vunpack.c.h.b16 %v310
  %v571 = vunpack.c.l.b16 %v311
  %v572 = vunpack.c.h.b16 %v311
  %v573 = vunpack.c.l.b16 %v312
  %v574 = vunpack.c.h.b16 %v312
  %v575 = vunpack.c.l.b16 %v313
  %v576 = vunpack.c.h.b16 %v313
  %v577 = vunpack.c.l.b16 %v314
  %v578 = vunpack.c.h.b16 %v314
  %v579 = vunpack.c.l.b16 %v315
  %v580 = vunpack.c.h.b16 %v315
  %v581 = vunpack.c.l.b16 %v316
  %v582 = vunpack.c.h.b16 %v316
  %v583 = vunpack.c.l.b16 %v317
  %v584 = vunpack.c.h.b16 %v317
  %v585 = vunpack.c.l.b16 %v318
  %v586 = vunpack.c.h.b16 %v318
  %v587 = vunpack.c.l.b16 %v319
  %v588 = vunpack.c.h.b16 %v319
  %v589 = vunpack.c.l.b16 %v320
  %v590 = vunpack.c.h.b16 %v320
  %v591 = vunpack.c.l.b16 %v321
  %v592 = vunpack.c.h.b16 %v321
  %v593 = vunpack.c.l.b16 %v322
  %v594 = vunpack.c.h.b16 %v322
  %v595 = vunpack.c.l.b16 %v323
  %v596 = vunpack.c.h.b16 %v323
  %v597 = vunpack.c.l.b16 %v324
  %v598 = vunpack.c.h.b16 %v324
  %v599 = vunpack.c.l.b16 %v325
  %v600 = vunpack.c.h.b16 %v325
  %v601 = vunpack.c.l.b16 %v326
  %v602 = vunpack.c.h.b16 %v326
  %v603 = vunpack.c.l.b16 %v327
  %v604 = vunpack.c.h.b16 %v327
  %v605 = vunpack.c.l.b16 %v328
  %v606 = vunpack.c.h.b16 %v328
  %v607 = vunpack.c.l.b16 %v329
  %v608 = vunpack.c.h.b16 %v329
  %v609 = vunpack.c.l.b16 %v330
  %v610 = vunpack.c.h.b16 %v330
  %v611 = vunpack.c.l.b16 %v331
  %v612 = vunpack.c.h.b16 %v331
  %v613 = vunpack.c.l.b16 %v332
  %v614 = vunpack.c.h.b16 %v332
  %v615 = vunpack.c.l.b16 %v333
  %v616 = vunpack.c.h.b16 %v333
  %v617 = vunpack.c.l.b16 %v334
  %v618 = vunpack.c.h.b16 %v334
  %v619 = vunpack.c.l.b16 %v335
  %v620 = vunpack.c.h.b16 %v335
  %v621 = vunpack.c.l.b16 %v336
  %v622 = vunpack.c.h.b16 %v336
  %v623 = vunpack.c.l.b16 %v337
  %v624 = vunpack.c.h.b16 %v337
  %v625 = vunpack.c.l.b16 %v338
  %v626 = vunpack.c.h.b16 %v338
  %v627 = vunpack.c.l.b16 %v339
  %v628 = vunpack.c.h.b16 %v339
  %v629 = vunpack.c.l.b16 %v340
  %v630 = vunpack.c.h.b16 %v340
  %v631 = vunpack.c.l.b16 %v341
  %v632 = vunpack.c.h.b16 %v341
  %v633 = vunpack.c.l.b16 %v342
  %v634 = vunpack.c.h.b16 %v342
  %v635 = vunpack.c.l.b16 %v343
  %v636 = vunpack.c.h.b16 %v343
  %v637 = vunpack.c.l.b16 %v344
  %v638 = vunpack.c.h.b16 %v344
  %v639 = vunpack.c.l.b16 %v345
  %v640 = vunpack.c.h.b16 %v345
  %v641 = vunpack.c.l.b16 %v346
  %v642 = vunpack.c.h.b16 %v346
  %v643 = vunpack.c.l.b16 %v347
  %v644 = vunpack.c.h.b16 %v347
  %v645 = vunpack.c.l.b16 %v348
  %v646 = vunpack.c.h.b16 %v348
  %v647 = vpack.c.b16 %v459, %v455
  %v648 = vpack.c.b16 %v460, %v456
  %v649 = vpack.c.b16 %v461, %v457
  %v650 = vpack.c.b16 %v462, %v458
  %v651 = vpack.c.b16 %v467, %v463
  %v652 = vpack.c.b16 %v468, %v464
  %v653 = vpack.c.b16 %v469, %v465
  %v654 = vpack.c.b16 %v470, %v466
  %v655 = vpack.c.b16 %v475, %v471
  %v656 = vpack.c.b16 %v476, %v472
  %v657 = vpack.c.b16 %v477, %v473
  %v658 = vpack.c.b16 %v478, %v474
  %v659 = vpack.c.b16 %v483, %v479
  %v660 = vpack.c.b16 %v484, %v480
  %v661 = vpack.c.b16 %v485, %v481
  %v662 = vpack.c.b16 %v486, %v482
  %v663 = vpack.c.b16 %v491, %v487
  %v664 = vpack.c.b16 %v492, %v488
  %v665 = vpack.c.b16 %v493, %v489
  %v666 = vpack.c.b16 %v494, %v490
  %v667 = vpack.c.b16 %v499, %v495
  %v668 = vpack.c.b16 %v500, %v496
  %v669 = vpack.c.b16 %v501, %v497
  %v670 = vpack.c.b16 %v502, %v498
  %v671 = vpack.c.b16 %v507, %v503
  %v672 = vpack.c.b16 %v508, %v504
  %v673 = vpack.c.b16 %v509, %v505
  %v674 = vpack.c.b16 %v510, %v506
  %v675 = vpack.c.b16 %v515, %v511
  %v676 = vpack.c.b16 %v516, %v512
  %v677 = vpack.c.b16 %v517, %v513
  %v678 = vpack.c.b16 %v518, %v514
  %v679 = vpack.c.b16 %v523, %v519
  %v680 = vpack.c.b16 %v524, %v520
  %v681 = vpack.c.b16 %v525, %v521
  %v682 = vpack.c.b16 %v526, %v522
  %v683 = vpack.c.b16 %v531, %v527
  %v684 = vpack.c.b16 %v532, %v528
  %v685 = vpack.c.b16 %v533, %v529
  %v686 = vpack.c.b16 %v534, %v530
  %v687 = vpack.c.b16 %v539, %v535
  %v688 = vpack.c.b16 %v540, %v536
  %v689 = vpack.c.b16 %v541, %v537
  %v690 = vpack.c.b16 %v542, %v538
  %v691 = vpack.c.b16 %v547, %v543
  %v692 = vpack.c.b16 %v548, %v544
  %v693 = vpack.c.b16 %v549, %v545
  %v694 = vpack.c.b16 %v550, %v546
  %v695 = vpack.c.b16 %v555, %v551
  %v696 = vpack.c.b16 %v556, %v552
  %v697 = vpack.c.b16 %v557, %v553
  %v698 = vpack.c.b16 %v558, %v554
  %v699 = vpack.c.b16 %v563, %v559
  %v700 = vpack.c.b16 %v564, %v560
  %v701 = vpack.c.b16 %v565, %v561
  %v702 = vpack.c.b16 %v566, %v562
  %v703 = vpack.c.b16 %v571, %v567
  %v704 = vpack.c.b16 %v572, %v568
  %v705 = vpack.c.b16 %v573, %v569
  %v706 = vpack.c.b16 %v574, %v570
  %v707 = vpack.c.b16 %v579, %v575
  %v708 = vpack.c.b16 %v580, %v576
  %v709 = vpack.c.b16 %v581, %v577
  %v710 = vpack.c.b16 %v582, %v578
  %v711 = vpack.c.b16 %v587, %v583
  %v712 = vpack.c.b16 %v588, %v584
  %v713 = vpack.c.b16 %v589, %v585
  %v714 = vpack.c.b16 %v590, %v586
  %v715 = vpack.c.b16 %v595, %v591
  %v716 = vpack.c.b16 %v596, %v592
  %v717 = vpack.c.b16 %v597, %v593
  %v718 = vpack.c.b16 %v598, %v594
  %v719 = vpack.c.b16 %v603, %v599
  %v720 = vpack.c.b16 %v604, %v600
  %v721 = vpack.c.b16 %v605, %v601
  %v722 = vpack.c.b16 %v606, %v602
  %v723 = vpack.c.b16 %v611, %v607
  %v724 = vpack.c.b16 %v612, %v608
  %v725 = vpack.c.b16 %v613, %v609
  %v726 = vpack.c.b16 %v614, %v610
  %v727 = vpack.c.b16 %v619, %v615
  %v728 = vpack.c.b16 %v620, %v616
  %v729 = vpack.c.b16 %v621, %v617
  %v730 = vpack.c.b16 %v622, %v618
  %v731 = vpack.c.b16 %v627, %v623
  %v732 = vpack.c.b16 %v628, %v624
  %v733 = vpack.c.b16 %v629, %v625
  %v734 = vpack.c.b16 %v630, %v626
  %v735 = vpack.c.b16 %v635, %v631
  %v736 = vpack.c.b16 %v636, %v632
  %v737 = vpack.c.b16 %v637, %v633
  %v738 = vpack.c.b16 %v638, %v634
  %v739 = vpack.c.b16 %v643, %v639
  %v740 = vpack.c.b16 %v644, %v640
  %v741 = vpack.c.b16 %v645, %v641
  %v742 = vpack.c.b16 %v646, %v642
  %839 = vmatpush.bf16.msra.mxu0 %v675
  %840 = vmatpush.bf16.msra.mxu0 %v671
  %841 = vmatpush.bf16.msra.mxu0 %v667
  %842 = vmatpush.bf16.msra.mxu0 %v663
  %843 = vmatpush.bf16.msra.mxu0 %v659
  %844 = vmatpush.bf16.msra.mxu0 %v655
  %845 = vmatpush.bf16.msra.mxu0 %v651
  %846 = vmatpush.bf16.msra.mxu0 %v647
  %847 = vmatmul.bf16.gmra.mxu0 %v250
  %v848 = vpop.f32.mrf.mxu0
  %v849 = vadd.f32 %v351, %v848
  %v850 = vpop.f32.mrf.mxu0
  %v851 = vadd.f32 %v351, %v850
  %852 = vdwg.mxu0
  %853 = vmatpush.bf16.msra.mxu0 %v707
  %854 = vmatpush.bf16.msra.mxu0 %v703
  %855 = vmatpush.bf16.msra.mxu0 %v699
  %856 = vmatpush.bf16.msra.mxu0 %v695
  %857 = vmatpush.bf16.msra.mxu0 %v691
  %858 = vmatpush.bf16.msra.mxu0 %v687
  %859 = vmatpush.bf16.msra.mxu0 %v683
  %860 = vmatpush.bf16.msra.mxu0 %v679
  %861 = vmatmul.bf16.gmra.mxu0 %v251
  %v862 = vpop.f32.mrf.mxu0
  %v863 = vadd.f32 %v849, %v862
  %v864 = vpop.f32.mrf.mxu0
  %v865 = vadd.f32 %v851, %v864
  %866 = vdwg.mxu0
  %867 = vmatpush.bf16.msra.mxu0 %v739
  %868 = vmatpush.bf16.msra.mxu0 %v735
  %869 = vmatpush.bf16.msra.mxu0 %v731
  %870 = vmatpush.bf16.msra.mxu0 %v727
  %871 = vmatpush.bf16.msra.mxu0 %v723
  %872 = vmatpush.bf16.msra.mxu0 %v719
  %873 = vmatpush.bf16.msra.mxu0 %v715
  %874 = vmatpush.bf16.msra.mxu0 %v711
  %875 = vmatmul.bf16.gmra.mxu0 %v252
  %v876 = vpop.f32.mrf.mxu0
  %v877 = vadd.f32 %v863, %v876
  %v878 = vpop.f32.mrf.mxu0
  %v879 = vadd.f32 %v865, %v878
  %880 = vdwg.mxu0
  %881 = vmatpush.bf16.msra.mxu0 %v676
  %882 = vmatpush.bf16.msra.mxu0 %v672
  %883 = vmatpush.bf16.msra.mxu0 %v668
  %884 = vmatpush.bf16.msra.mxu0 %v664
  %885 = vmatpush.bf16.msra.mxu0 %v660
  %886 = vmatpush.bf16.msra.mxu0 %v656
  %887 = vmatpush.bf16.msra.mxu0 %v652
  %888 = vmatpush.bf16.msra.mxu0 %v648
  %889 = vmatmul.bf16.gmra.mxu0 %v250
  %v890 = vpop.f32.mrf.mxu0
  %v891 = vadd.f32 %v352, %v890
  %v892 = vpop.f32.mrf.mxu0
  %v893 = vadd.f32 %v352, %v892
  %894 = vdwg.mxu0
  %895 = vmatpush.bf16.msra.mxu0 %v708
  %896 = vmatpush.bf16.msra.mxu0 %v704
  %897 = vmatpush.bf16.msra.mxu0 %v700
  %898 = vmatpush.bf16.msra.mxu0 %v696
  %899 = vmatpush.bf16.msra.mxu0 %v692
  %900 = vmatpush.bf16.msra.mxu0 %v688
  %901 = vmatpush.bf16.msra.mxu0 %v684
  %902 = vmatpush.bf16.msra.mxu0 %v680
  %903 = vmatmul.bf16.gmra.mxu0 %v251
  %v904 = vpop.f32.mrf.mxu0
  %v905 = vadd.f32 %v891, %v904
  %v906 = vpop.f32.mrf.mxu0
  %v907 = vadd.f32 %v893, %v906
  %908 = vdwg.mxu0
  %909 = vmatpush.bf16.msra.mxu0 %v740
  %910 = vmatpush.bf16.msra.mxu0 %v736
  %911 = vmatpush.bf16.msra.mxu0 %v732
  %912 = vmatpush.bf16.msra.mxu0 %v728
  %913 = vmatpush.bf16.msra.mxu0 %v724
  %914 = vmatpush.bf16.msra.mxu0 %v720
  %915 = vmatpush.bf16.msra.mxu0 %v716
  %916 = vmatpush.bf16.msra.mxu0 %v712
  %917 = vmatmul.bf16.gmra.mxu0 %v252
  %v918 = vpop.f32.mrf.mxu0
  %v919 = vadd.f32 %v905, %v918
  %v920 = vpop.f32.mrf.mxu0
  %v921 = vadd.f32 %v907, %v920
  %922 = vdwg.mxu0
  %923 = vmatpush.bf16.msra.mxu0 %v677
  %924 = vmatpush.bf16.msra.mxu0 %v673
  %925 = vmatpush.bf16.msra.mxu0 %v669
  %926 = vmatpush.bf16.msra.mxu0 %v665
  %927 = vmatpush.bf16.msra.mxu0 %v661
  %928 = vmatpush.bf16.msra.mxu0 %v657
  %929 = vmatpush.bf16.msra.mxu0 %v653
  %930 = vmatpush.bf16.msra.mxu0 %v649
  %931 = vmatmul.bf16.gmra.mxu0 %v250
  %v932 = vpop.f32.mrf.mxu0
  %v933 = vadd.f32 %v353, %v932
  %v934 = vpop.f32.mrf.mxu0
  %v935 = vadd.f32 %v353, %v934
  %936 = vdwg.mxu0
  %937 = vmatpush.bf16.msra.mxu0 %v709
  %938 = vmatpush.bf16.msra.mxu0 %v705
  %939 = vmatpush.bf16.msra.mxu0 %v701
  %940 = vmatpush.bf16.msra.mxu0 %v697
  %941 = vmatpush.bf16.msra.mxu0 %v693
  %942 = vmatpush.bf16.msra.mxu0 %v689
  %943 = vmatpush.bf16.msra.mxu0 %v685
  %944 = vmatpush.bf16.msra.mxu0 %v681
  %945 = vmatmul.bf16.gmra.mxu0 %v251
  %v946 = vpop.f32.mrf.mxu0
  %v947 = vadd.f32 %v933, %v946
  %v948 = vpop.f32.mrf.mxu0
  %v949 = vadd.f32 %v935, %v948
  %950 = vdwg.mxu0
  %951 = vmatpush.bf16.msra.mxu0 %v741
  %952 = vmatpush.bf16.msra.mxu0 %v737
  %953 = vmatpush.bf16.msra.mxu0 %v733
  %954 = vmatpush.bf16.msra.mxu0 %v729
  %955 = vmatpush.bf16.msra.mxu0 %v725
  %956 = vmatpush.bf16.msra.mxu0 %v721
  %957 = vmatpush.bf16.msra.mxu0 %v717
  %958 = vmatpush.bf16.msra.mxu0 %v713
  %959 = vmatmul.bf16.gmra.mxu0 %v252
  %v960 = vpop.f32.mrf.mxu0
  %v961 = vadd.f32 %v947, %v960
  %v962 = vpop.f32.mrf.mxu0
  %v963 = vadd.f32 %v949, %v962
  %964 = vdwg.mxu0
  %965 = vmatpush.bf16.msra.mxu0 %v678
  %966 = vmatpush.bf16.msra.mxu0 %v674
  %967 = vmatpush.bf16.msra.mxu0 %v670
  %968 = vmatpush.bf16.msra.mxu0 %v666
  %969 = vmatpush.bf16.msra.mxu0 %v662
  %970 = vmatpush.bf16.msra.mxu0 %v658
  %971 = vmatpush.bf16.msra.mxu0 %v654
  %972 = vmatpush.bf16.msra.mxu0 %v650
  %973 = vmatmul.bf16.gmra.mxu0 %v250
  %v974 = vpop.f32.mrf.mxu0
  %v975 = vadd.f32 %v354, %v974
  %v976 = vpop.f32.mrf.mxu0
  %v977 = vadd.f32 %v354, %v976
  %978 = vdwg.mxu0
  %979 = vmatpush.bf16.msra.mxu0 %v710
  %980 = vmatpush.bf16.msra.mxu0 %v706
  %981 = vmatpush.bf16.msra.mxu0 %v702
  %982 = vmatpush.bf16.msra.mxu0 %v698
  %983 = vmatpush.bf16.msra.mxu0 %v694
  %984 = vmatpush.bf16.msra.mxu0 %v690
  %985 = vmatpush.bf16.msra.mxu0 %v686
  %986 = vmatpush.bf16.msra.mxu0 %v682
  %987 = vmatmul.bf16.gmra.mxu0 %v251
  %v988 = vpop.f32.mrf.mxu0
  %v989 = vadd.f32 %v975, %v988
  %v990 = vpop.f32.mrf.mxu0
  %v991 = vadd.f32 %v977, %v990
  %992 = vdwg.mxu0
  %993 = vmatpush.bf16.msra.mxu0 %v742
  %994 = vmatpush.bf16.msra.mxu0 %v738
  %995 = vmatpush.bf16.msra.mxu0 %v734
  %996 = vmatpush.bf16.msra.mxu0 %v730
  %997 = vmatpush.bf16.msra.mxu0 %v726
  %998 = vmatpush.bf16.msra.mxu0 %v722
  %999 = vmatpush.bf16.msra.mxu0 %v718
  %1000 = vmatpush.bf16.msra.mxu0 %v714
  %1001 = vmatmul.bf16.gmra.mxu0 %v252
  %v1002 = vpop.f32.mrf.mxu0
  %v1003 = vadd.f32 %v989, %v1002
  %v1004 = vpop.f32.mrf.mxu0
  %v1005 = vadd.f32 %v991, %v1004
  %1006 = vdwg.mxu0
  %v1007 = vmax.f32 %v877, 0.0
  %v1008 = vmax.f32 %v919, 0.0
  %v1009 = vmax.f32 %v961, 0.0
  %v1010 = vmax.f32 %v1003, 0.0
  %v1011 = vmax.f32 %v879, 0.0
  %v1012 = vmax.f32 %v921, 0.0
  %v1013 = vmax.f32 %v963, 0.0
  %v1014 = vmax.f32 %v1005, 0.0
  %v1015 = vpack.c.bf16 %v1011, %v1007
  %v1016 = vpack.c.bf16 %v1012, %v1008
  %v1017 = vpack.c.bf16 %v1013, %v1009
  %v1018 = vpack.c.bf16 %v1014, %v1010
  %v1019 = vld [vmem:[%s5] sm:$0xf]
  %v1020 = vld [vmem:[%s5 + $0x4] sm:$0xf]
  %v1021 = vld [vmem:[%s5 + $0x8] sm:$0xf]
  %v1022 = vld [vmem:[%s5 + $0xc] sm:$0xf]
  %v1023 = vld [vmem:[%s5 + $0x10] sm:$0xf]
  %v1024 = vld [vmem:[%s5 + $0x14] sm:$0xf]
  %v1025 = vld [vmem:[%s5 + $0x18] sm:$0xf]
  %v1026 = vld [vmem:[%s5 + $0x1c] sm:$0xf]
  %v1027 = vld [vmem:[%s5 + $0x20] sm:$0xf]
  %v1028 = vld [vmem:[%s5 + $0x24] sm:$0xf]
  %v1029 = vld [vmem:[%s5 + $0x28] sm:$0xf]
  %v1030 = vld [vmem:[%s5 + $0x2c] sm:$0xf]
  %v1031 = vld [vmem:[%s5 + $0x30] sm:$0xf]
  %v1032 = vld [vmem:[%s5 + $0x34] sm:$0xf]
  %v1033 = vld [vmem:[%s5 + $0x38] sm:$0xf]
  %v1034 = vld [vmem:[%s5 + $0x3c] sm:$0xf]
  %v1035 = vld [vmem:[%s5 + $0x40] sm:$0xf]
  %v1036 = vld [vmem:[%s5 + $0x44] sm:$0xf]
  %v1037 = vld [vmem:[%s5 + $0x48] sm:$0xf]
  %v1038 = vld [vmem:[%s5 + $0x4c] sm:$0xf]
  %v1039 = vld [vmem:[%s5 + $0x50] sm:$0xf]
  %v1040 = vld [vmem:[%s5 + $0x54] sm:$0xf]
  %v1041 = vld [vmem:[%s5 + $0x58] sm:$0xf]
  %v1042 = vld [vmem:[%s5 + $0x5c] sm:$0xf]
  %v1043 = vld [vmem:[%s5 + $0x60] sm:$0xf]
  %v1044 = vld [vmem:[%s5 + $0x64] sm:$0xf]
  %v1045 = vld [vmem:[%s5 + $0x68] sm:$0xf]
  %v1046 = vld [vmem:[%s5 + $0x6c] sm:$0xf]
  %v1047 = vld [vmem:[%s5 + $0x70] sm:$0xf]
  %v1048 = vld [vmem:[%s5 + $0x74] sm:$0xf]
  %v1049 = vld [vmem:[%s5 + $0x78] sm:$0xf]
  %v1050 = vld [vmem:[%s5 + $0x7c] sm:$0xf]
  %v1051 = vld [vmem:[%s5 + $0x80] sm:$0xf]
  %v1052 = vld [vmem:[%s5 + $0x84] sm:$0xf]
  %v1053 = vld [vmem:[%s5 + $0x88] sm:$0xf]
  %v1054 = vld [vmem:[%s5 + $0x8c] sm:$0xf]
  %v1055 = vld [vmem:[%s5 + $0x90] sm:$0xf]
  %v1056 = vld [vmem:[%s5 + $0x94] sm:$0xf]
  %v1057 = vld [vmem:[%s5 + $0x98] sm:$0xf]
  %v1058 = vld [vmem:[%s5 + $0x9c] sm:$0xf]
  %v1059 = vld [vmem:[%s5 + $0xa0] sm:$0xf]
  %v1060 = vld [vmem:[%s5 + $0xa4] sm:$0xf]
  %v1061 = vld [vmem:[%s5 + $0xa8] sm:$0xf]
  %v1062 = vld [vmem:[%s5 + $0xac] sm:$0xf]
  %v1063 = vld [vmem:[%s5 + $0xb0] sm:$0xf]
  %v1064 = vld [vmem:[%s5 + $0xb4] sm:$0xf]
  %v1065 = vld [vmem:[%s5 + $0xb8] sm:$0xf]
  %v1066 = vld [vmem:[%s5 + $0xbc] sm:$0xf]
  %v1067 = vld [vmem:[%s5 + $0xc0] sm:$0xf]
  %v1068 = vld [vmem:[%s5 + $0xc4] sm:$0xf]
  %v1069 = vld [vmem:[%s5 + $0xc8] sm:$0xf]
  %v1070 = vld [vmem:[%s5 + $0xcc] sm:$0xf]
  %v1071 = vld [vmem:[%s5 + $0xd0] sm:$0xf]
  %v1072 = vld [vmem:[%s5 + $0xd4] sm:$0xf]
  %v1073 = vld [vmem:[%s5 + $0xd8] sm:$0xf]
  %v1074 = vld [vmem:[%s5 + $0xdc] sm:$0xf]
  %v1075 = vld [vmem:[%s5 + $0xe0] sm:$0xf]
  %v1076 = vld [vmem:[%s5 + $0xe4] sm:$0xf]
  %v1077 = vld [vmem:[%s5 + $0xe8] sm:$0xf]
  %v1078 = vld [vmem:[%s5 + $0xec] sm:$0xf]
  %v1079 = vld [vmem:[%s5 + $0xf0] sm:$0xf]
  %v1080 = vld [vmem:[%s5 + $0xf4] sm:$0xf]
  %v1081 = vld [vmem:[%s5 + $0xf8] sm:$0xf]
  %v1082 = vld [vmem:[%s5 + $0xfc] sm:$0xf]
  %v1083 = vld [vmem:[%s6] sm:$0x1]
  %v1085 = vperm.slane %v1083, 0
  %v1151 = vunpack.c.l.b16 %v1019
  %v1152 = vunpack.c.l.b16 %v1020
  %v1153 = vunpack.c.l.b16 %v1021
  %v1154 = vunpack.c.l.b16 %v1022
  %v1155 = vunpack.c.l.b16 %v1023
  %v1156 = vunpack.c.l.b16 %v1024
  %v1157 = vunpack.c.l.b16 %v1025
  %v1158 = vunpack.c.l.b16 %v1026
  %v1159 = vunpack.c.l.b16 %v1027
  %v1160 = vunpack.c.l.b16 %v1028
  %v1161 = vunpack.c.l.b16 %v1029
  %v1162 = vunpack.c.l.b16 %v1030
  %v1163 = vunpack.c.l.b16 %v1031
  %v1164 = vunpack.c.l.b16 %v1032
  %v1165 = vunpack.c.l.b16 %v1033
  %v1166 = vunpack.c.l.b16 %v1034
  %v1167 = vunpack.c.l.b16 %v1035
  %v1168 = vunpack.c.l.b16 %v1036
  %v1169 = vunpack.c.l.b16 %v1037
  %v1170 = vunpack.c.l.b16 %v1038
  %v1171 = vunpack.c.l.b16 %v1039
  %v1172 = vunpack.c.l.b16 %v1040
  %v1173 = vunpack.c.l.b16 %v1041
  %v1174 = vunpack.c.l.b16 %v1042
  %v1175 = vunpack.c.l.b16 %v1043
  %v1176 = vunpack.c.l.b16 %v1044
  %v1177 = vunpack.c.l.b16 %v1045
  %v1178 = vunpack.c.l.b16 %v1046
  %v1179 = vunpack.c.l.b16 %v1047
  %v1180 = vunpack.c.l.b16 %v1048
  %v1181 = vunpack.c.l.b16 %v1049
  %v1182 = vunpack.c.l.b16 %v1050
  %v1183 = vunpack.c.l.b16 %v1051
  %v1184 = vunpack.c.l.b16 %v1052
  %v1185 = vunpack.c.l.b16 %v1053
  %v1186 = vunpack.c.l.b16 %v1054
  %v1187 = vunpack.c.l.b16 %v1055
  %v1188 = vunpack.c.l.b16 %v1056
  %v1189 = vunpack.c.l.b16 %v1057
  %v1190 = vunpack.c.l.b16 %v1058
  %v1191 = vunpack.c.l.b16 %v1059
  %v1192 = vunpack.c.l.b16 %v1060
  %v1193 = vunpack.c.l.b16 %v1061
  %v1194 = vunpack.c.l.b16 %v1062
  %v1195 = vunpack.c.l.b16 %v1063
  %v1196 = vunpack.c.l.b16 %v1064
  %v1197 = vunpack.c.l.b16 %v1065
  %v1198 = vunpack.c.l.b16 %v1066
  %v1199 = vunpack.c.l.b16 %v1067
  %v1200 = vunpack.c.l.b16 %v1068
  %v1201 = vunpack.c.l.b16 %v1069
  %v1202 = vunpack.c.l.b16 %v1070
  %v1203 = vunpack.c.l.b16 %v1071
  %v1204 = vunpack.c.l.b16 %v1072
  %v1205 = vunpack.c.l.b16 %v1073
  %v1206 = vunpack.c.l.b16 %v1074
  %v1207 = vunpack.c.l.b16 %v1075
  %v1208 = vunpack.c.l.b16 %v1076
  %v1209 = vunpack.c.l.b16 %v1077
  %v1210 = vunpack.c.l.b16 %v1078
  %v1211 = vunpack.c.l.b16 %v1079
  %v1212 = vunpack.c.l.b16 %v1080
  %v1213 = vunpack.c.l.b16 %v1081
  %v1214 = vunpack.c.l.b16 %v1082
  %v1215 = vpack.c.b16 %v1152, %v1151
  %v1216 = vpack.c.b16 %v1154, %v1153
  %v1217 = vpack.c.b16 %v1156, %v1155
  %v1218 = vpack.c.b16 %v1158, %v1157
  %v1219 = vpack.c.b16 %v1160, %v1159
  %v1220 = vpack.c.b16 %v1162, %v1161
  %v1221 = vpack.c.b16 %v1164, %v1163
  %v1222 = vpack.c.b16 %v1166, %v1165
  %v1223 = vpack.c.b16 %v1168, %v1167
  %v1224 = vpack.c.b16 %v1170, %v1169
  %v1225 = vpack.c.b16 %v1172, %v1171
  %v1226 = vpack.c.b16 %v1174, %v1173
  %v1227 = vpack.c.b16 %v1176, %v1175
  %v1228 = vpack.c.b16 %v1178, %v1177
  %v1229 = vpack.c.b16 %v1180, %v1179
  %v1230 = vpack.c.b16 %v1182, %v1181
  %v1231 = vpack.c.b16 %v1184, %v1183
  %v1232 = vpack.c.b16 %v1186, %v1185
  %v1233 = vpack.c.b16 %v1188, %v1187
  %v1234 = vpack.c.b16 %v1190, %v1189
  %v1235 = vpack.c.b16 %v1192, %v1191
  %v1236 = vpack.c.b16 %v1194, %v1193
  %v1237 = vpack.c.b16 %v1196, %v1195
  %v1238 = vpack.c.b16 %v1198, %v1197
  %v1239 = vpack.c.b16 %v1200, %v1199
  %v1240 = vpack.c.b16 %v1202, %v1201
  %v1241 = vpack.c.b16 %v1204, %v1203
  %v1242 = vpack.c.b16 %v1206, %v1205
  %v1243 = vpack.c.b16 %v1208, %v1207
  %v1244 = vpack.c.b16 %v1210, %v1209
  %v1245 = vpack.c.b16 %v1212, %v1211
  %v1246 = vpack.c.b16 %v1214, %v1213
  %1279 = vmatpush.bf16.msra.mxu0 %v1222
  %1280 = vmatpush.bf16.msra.mxu0 %v1221
  %1281 = vmatpush.bf16.msra.mxu0 %v1220
  %1282 = vmatpush.bf16.msra.mxu0 %v1219
  %1283 = vmatpush.bf16.msra.mxu0 %v1218
  %1284 = vmatpush.bf16.msra.mxu0 %v1217
  %1285 = vmatpush.bf16.msra.mxu0 %v1216
  %1286 = vmatpush.bf16.msra.mxu0 %v1215
  %1287 = vmatmul.bf16.gmra.mxu0 %v1015
  %v1288 = vpop.f32.mrf.mxu0
  %v1289 = vadd.f32 %v1085, %v1288
  %v1290 = vpop.f32.mrf.mxu0
  %v1291 = vadd.f32 %v1085, %v1290
  %1292 = vdwg.mxu0
  %1293 = vmatpush.bf16.msra.mxu0 %v1230
  %1294 = vmatpush.bf16.msra.mxu0 %v1229
  %1295 = vmatpush.bf16.msra.mxu0 %v1228
  %1296 = vmatpush.bf16.msra.mxu0 %v1227
  %1297 = vmatpush.bf16.msra.mxu0 %v1226
  %1298 = vmatpush.bf16.msra.mxu0 %v1225
  %1299 = vmatpush.bf16.msra.mxu0 %v1224
  %1300 = vmatpush.bf16.msra.mxu0 %v1223
  %1301 = vmatmul.bf16.gmra.mxu0 %v1016
  %v1302 = vpop.f32.mrf.mxu0
  %v1303 = vadd.f32 %v1289, %v1302
  %v1304 = vpop.f32.mrf.mxu0
  %v1305 = vadd.f32 %v1291, %v1304
  %1306 = vdwg.mxu0
  %1307 = vmatpush.bf16.msra.mxu0 %v1238
  %1308 = vmatpush.bf16.msra.mxu0 %v1237
  %1309 = vmatpush.bf16.msra.mxu0 %v1236
  %1310 = vmatpush.bf16.msra.mxu0 %v1235
  %1311 = vmatpush.bf16.msra.mxu0 %v1234
  %1312 = vmatpush.bf16.msra.mxu0 %v1233
  %1313 = vmatpush.bf16.msra.mxu0 %v1232
  %1314 = vmatpush.bf16.msra.mxu0 %v1231
  %1315 = vmatmul.bf16.gmra.mxu0 %v1017
  %v1316 = vpop.f32.mrf.mxu0
  %v1317 = vadd.f32 %v1303, %v1316
  %v1318 = vpop.f32.mrf.mxu0
  %v1319 = vadd.f32 %v1305, %v1318
  %1320 = vdwg.mxu0
  %1321 = vmatpush.bf16.msra.mxu0 %v1246
  %1322 = vmatpush.bf16.msra.mxu0 %v1245
  %1323 = vmatpush.bf16.msra.mxu0 %v1244
  %1324 = vmatpush.bf16.msra.mxu0 %v1243
  %1325 = vmatpush.bf16.msra.mxu0 %v1242
  %1326 = vmatpush.bf16.msra.mxu0 %v1241
  %1327 = vmatpush.bf16.msra.mxu0 %v1240
  %1328 = vmatpush.bf16.msra.mxu0 %v1239
  %1329 = vmatmul.bf16.gmra.mxu0 %v1018
  %v1330 = vpop.f32.mrf.mxu0
  %v1331 = vadd.f32 %v1317, %v1330
  %v1332 = vpop.f32.mrf.mxu0
  %v1333 = vadd.f32 %v1319, %v1332
  %1334 = vdwg.mxu0
  %v1335 = vtanh.pop %v1331
  %v1336 = vtanh.pop %v1333
  %v1337 = vmul.f32 %v1335, 2.0
  %v1338 = vmul.f32 %v1336, 2.0
  %1339 = vst [vmem:[%s7] sm:$0xff] %v1337
  %1340 = vst [vmem:[%s7 + $0x8] sm:$0xff] %v1338
  // Predicated region
  $region30: #{actor_forward.1} parent=0 // pred_check
    _
  $region31: #{actor_forward.1} parent=0 // pred_check_branch
    %1342 = sbr.rel (0) target = $region33
  $region32: #{actor_forward.1} parent=0 // pred_region
    _
  $region33: #{actor_forward.1} parent=0 // pred_fallthru
    _
  // Predicated region
  $region34: #{actor_forward.1} parent=0 // pred_check
    _
  $region35: #{actor_forward.1} parent=0 // pred_check_branch
    %1344 = sbr.rel (0) target = $region37
  $region36: #{actor_forward.1} parent=0 // pred_region
    _
  $region37: #{actor_forward.1} parent=0 // pred_fallthru
    _

</llo_original>
